<compile_context>
chip_gen: v7x
topology: tpu7x:2x2x1
jax: 0.10.0
libtpu: 0.0.40
codegen_flags: <defaults>
</compile_context>

<pallas_src>
import jax
import jax.numpy as jnp
from jax import lax
from jax.experimental import pallas as pl
from jax.experimental.pallas import tpu as pltpu

_LANE = 128
_EPS = 1e-5
_TM = 256            # output rows (pixels) per grid step; multiple of 256 fills the v6e/v7x MXU


def _round_up(x, m):
    return (x + m - 1) // m * m


def _convblock_kernel(p_ref, w_ref, b_ref, o_ref):
    """One (image, row-tile) per grid step.

    p_ref: (1, TM, Kp)   im2col patches, bf16; column = tap*Cin + cin, Kp = round_up(9*Cin, 128)
    w_ref: (Kp, Cop)     conv weights, row = tap*Cin + cin, bf16
    b_ref: (1, Cop)      conv bias, f32
    o_ref: (1, TM, Cop)  output rows, f32, lane-dense Cop
    """
    acc = jnp.dot(p_ref[0], w_ref[...], preferred_element_type=jnp.float32)
    o_ref[0] = jnp.maximum(acc + b_ref[0], 0.0).astype(o_ref.dtype)


@jax.jit
def conv_block_forward(x_nchw, conv_w_oihw, conv_b, bn_gamma, bn_beta):
    """ConvBlock forward. Input/output follow the PyTorch NCHW convention."""
    N, Cin, H, W = x_nchw.shape
    Cout = conv_w_oihw.shape[0]
    K = 9 * Cin
    Kp = _round_up(K, _LANE)
    Cop = _round_up(Cout, _LANE)
    M = H * W
    M_pad = _round_up(M, _TM)

    x = x_nchw.astype(jnp.float32)

    # Training-mode BatchNorm statistics (biased variance over N,H,W), folded
    # into per-channel scale/shift.  Tiny reduction on the raw layout.
    mean = jnp.mean(x, axis=(0, 2, 3))
    var = jnp.mean(jnp.square(x - mean[None, :, None, None]), axis=(0, 2, 3))
    scale = bn_gamma.astype(jnp.float32) * lax.rsqrt(var + _EPS)
    shift = bn_beta.astype(jnp.float32) - mean * scale

    # BN affine fused into the NCHW->NHWC relayout, cast to bf16, then a
    # 1-pixel zero halo (Conv2d zero-pads AFTER BN, so pad the BN'd tensor).
    bn = jnp.transpose(x, (0, 2, 3, 1)) * scale + shift            # (N, H, W, Cin) f32
    bn = bn.astype(jnp.bfloat16)
    bn_pad = jnp.pad(bn, ((0, 0), (1, 1), (1, 1), (0, 0)))         # (N, H+2, W+2, Cin)

    # im2col with taps and channels folded together: column = tap*Cin + cin,
    # tap = dy*3 + dx.  Built here so the kernel sees lane-dense, aligned
    # operands and K is padded to a 128-lane tile exactly once.
    taps = [bn_pad[:, dy:dy + H, dx:dx + W, :]
            for dy in range(3) for dx in range(3)]
    patches = jnp.stack(taps, axis=3).reshape(N, M, K)             # (N, H*W, 9*Cin) bf16
    patches = jnp.pad(patches, ((0, 0), (0, M_pad - M), (0, Kp - K)))

    # OIHW -> (ky, kx, cin, cout) -> (9*Cin, Cout), zero-padded to (Kp, Cop), bf16.
    w_mat = jnp.transpose(conv_w_oihw.astype(jnp.float32), (2, 3, 1, 0))
    w_mat = w_mat.reshape(K, Cout)
    w_mat = jnp.pad(w_mat, ((0, Kp - K), (0, Cop - Cout))).astype(jnp.bfloat16)

    b_pad = jnp.pad(conv_b.astype(jnp.float32), (0, Cop - Cout)).reshape(1, Cop)

    grid_spec = pltpu.PrefetchScalarGridSpec(
        num_scalar_prefetch=0,
        grid=(N, M_pad // _TM),
        in_specs=[
            pl.BlockSpec((1, _TM, Kp), lambda n, m: (n, m, 0)),
            pl.BlockSpec((Kp, Cop), lambda n, m: (0, 0)),
            pl.BlockSpec((1, Cop), lambda n, m: (0, 0)),
        ],
        out_specs=pl.BlockSpec((1, _TM, Cop), lambda n, m: (n, m, 0)),
    )

    out = pl.pallas_call(
        _convblock_kernel,
        out_shape=jax.ShapeDtypeStruct((N, M_pad, Cop), jnp.float32),
        grid_spec=grid_spec,
        compiler_params=pltpu.CompilerParams(
            dimension_semantics=("parallel", "parallel")),
    )(patches, w_mat, b_pad)

    # Drop row / channel padding, back to NCHW.
    out = out[:, :M, :Cout].reshape(N, H, W, Cout)
    return jnp.transpose(out, (0, 3, 1, 2))


def _reference_forward(x_nchw, conv_w_oihw, conv_b, bn_gamma, bn_beta):
    """Pure-JAX reference with identical semantics (mirrors the bf16 MXU cast)."""
    x = x_nchw.astype(jnp.float32)
    mean = jnp.mean(x, axis=(0, 2, 3))
    var = jnp.mean(jnp.square(x - mean[None, :, None, None]), axis=(0, 2, 3))
    scale = bn_gamma.astype(jnp.float32) / jnp.sqrt(var + _EPS)
    shift = bn_beta.astype(jnp.float32) - mean * scale
    bn = jnp.transpose(x, (0, 2, 3, 1)) * scale + shift
    w_hwio = jnp.transpose(conv_w_oihw, (2, 3, 1, 0)).astype(jnp.bfloat16)
    out = lax.conv_general_dilated(
        bn.astype(jnp.bfloat16), w_hwio,
        window_strides=(1, 1), padding="SAME",
        dimension_numbers=("NHWC", "HWIO", "NHWC"),
        preferred_element_type=jnp.float32)
    out = jnp.maximum(out + conv_b.astype(jnp.float32), 0.0)
    return jnp.transpose(out, (0, 3, 1, 2))


if __name__ == "__main__":
    # Small shapes consistent with ConvBlock(in_channels=4, out_channels=8).
    N, Cin, Cout, H, W = 2, 4, 8, 16, 16

    key = jax.random.PRNGKey(0)
    kx, kw, kb, kg, kbt = jax.random.split(key, 5)

    x = jax.random.normal(kx, (N, Cin, H, W), dtype=jnp.float32)

    # Deterministic PyTorch-shaped parameters: Conv2d OIHW weight + bias,
    # BatchNorm2d gamma/beta.
    fan_in = Cin * 3 * 3
    bound = 1.0 / (fan_in ** 0.5)
    conv_w = jax.random.uniform(kw, (Cout, Cin, 3, 3), jnp.float32, -bound, bound)
    conv_b = jax.random.uniform(kb, (Cout,), jnp.float32, -bound, bound)
    bn_gamma = 1.0 + 0.1 * jax.random.normal(kg, (Cin,), jnp.float32)
    bn_beta = 0.1 * jax.random.normal(kbt, (Cin,), jnp.float32)

    out = conv_block_forward(x, conv_w, conv_b, bn_gamma, bn_beta)
    out = jax.block_until_ready(out)

    ref = _reference_forward(x, conv_w, conv_b, bn_gamma, bn_beta)
    assert out.shape == (N, Cout, H, W), out.shape
    max_err = float(jnp.max(jnp.abs(out - ref)))
    # bf16 MXU operands (mirrored in the reference) -> bf16-level tolerance.
    assert jnp.allclose(out, ref, atol=1e-2, rtol=1e-2), max_err

    print("KERNEL_OK")
</pallas_src>

<mosaic_0001>
module attributes {stable_mosaic.version = 11 : i64} {
  func.func @_convblock_kernel(%arg0: i32, %arg1: i32, %arg2: memref<1x256x128xbf16, #tpu.memory_space<vmem>>, %arg3: memref<128x128xbf16, #tpu.memory_space<vmem>>, %arg4: memref<1x128xf32, #tpu.memory_space<vmem>>, %arg5: memref<1x256x128xf32, #tpu.memory_space<vmem>>) attributes {dimension_semantics = [#tpu.dimension_semantics<parallel>, #tpu.dimension_semantics<parallel>], iteration_bounds = array<i64: 2, 1>, scalar_prefetch = 0 : i64, scratch_operands = 0 : i64, tpu.core_type = #tpu.core_type<tc>, window_params = [{transform_indices = @transform_0, window_bounds = array<i64: 1, 256, 128>}, {pipeline_mode = #tpu.pipeline_mode<synchronous>, transform_indices = @transform_1, window_bounds = array<i64: 128, 128>}, {pipeline_mode = #tpu.pipeline_mode<synchronous>, transform_indices = @transform_2, window_bounds = array<i64: 1, 128>}, {transform_indices = @transform_3, window_bounds = array<i64: 1, 256, 128>}]} {
    %c0 = arith.constant 0 : index
    %c0_0 = arith.constant 0 : index
    %c0_1 = arith.constant 0 : index
    %0 = vector.load %arg2[%c0, %c0_0, %c0_1] : memref<1x256x128xbf16, #tpu.memory_space<vmem>>, vector<1x256x128xbf16>
    %1 = vector.shape_cast %0 : vector<1x256x128xbf16> to vector<256x128xbf16>
    %c0_2 = arith.constant 0 : index
    %c0_3 = arith.constant 0 : index
    %2 = vector.load %arg3[%c0_2, %c0_3] : memref<128x128xbf16, #tpu.memory_space<vmem>>, vector<128x128xbf16>
    %cst = arith.constant dense<0.000000e+00> : vector<256x128xf32>
    %3 = tpu.matmul %1, %2, %cst {dimension_numbers = #tpu.dot_dimension_numbers<[1], [0], [0], [1], [0, 0, 1, 1], [], []>} : vector<256x128xbf16>, vector<128x128xbf16>, vector<256x128xf32> -> vector<256x128xf32>
    %c0_4 = arith.constant 0 : index
    %c0_5 = arith.constant 0 : index
    %4 = vector.load %arg4[%c0_4, %c0_5] : memref<1x128xf32, #tpu.memory_space<vmem>>, vector<1x128xf32>
    %5 = vector.shape_cast %4 : vector<1x128xf32> to vector<128xf32>
    %6 = vector.shape_cast %5 : vector<128xf32> to vector<1x128xf32>
    %7 = vector.broadcast %6 : vector<1x128xf32> to vector<256x128xf32>
    %8 = arith.addf %3, %7 : vector<256x128xf32>
    %cst_6 = arith.constant 0.000000e+00 : f32
    %9 = vector.broadcast %cst_6 : f32 to vector<256x128xf32>
    %10 = arith.maximumf %8, %9 : vector<256x128xf32>
    %c0_7 = arith.constant 0 : index
    %c0_8 = arith.constant 0 : index
    %c0_9 = arith.constant 0 : index
    %11 = vector.load %arg5[%c0_7, %c0_8, %c0_9] : memref<1x256x128xf32, #tpu.memory_space<vmem>>, vector<1x256x128xf32>
    %12 = vector.shape_cast %11 : vector<1x256x128xf32> to vector<256x128xf32>
    %13 = vector.shape_cast %10 : vector<256x128xf32> to vector<1x256x128xf32>
    tpu.vector_store %arg5[%c0_7, %c0_8, %c0_9], %13 {strides = array<i32>} : memref<1x256x128xf32, #tpu.memory_space<vmem>>, vector<1x256x128xf32>,
    return
  }
  func.func @transform_0(%arg0: i32, %arg1: i32) -> (i32, i32, i32) {
    %c0_i32 = arith.constant 0 : i32
    %c0_i32_0 = arith.constant 0 : i32
    return %arg0, %arg1, %c0_i32 : i32, i32, i32
  }
  func.func @transform_1(%arg0: i32, %arg1: i32) -> (i32, i32) {
    %c0_i32 = arith.constant 0 : i32
    %c0_i32_0 = arith.constant 0 : i32
    %c0_i32_1 = arith.constant 0 : i32
    return %c0_i32, %c0_i32_0 : i32, i32
  }
  func.func @transform_2(%arg0: i32, %arg1: i32) -> (i32, i32) {
    %c0_i32 = arith.constant 0 : i32
    %c0_i32_0 = arith.constant 0 : i32
    %c0_i32_1 = arith.constant 0 : i32
    return %c0_i32, %c0_i32_0 : i32, i32
  }
  func.func @transform_3(%arg0: i32, %arg1: i32) -> (i32, i32, i32) {
    %c0_i32 = arith.constant 0 : i32
    %c0_i32_0 = arith.constant 0 : i32
    return %arg0, %arg1, %c0_i32 : i32, i32, i32
  }
}

</mosaic_0001>

<llo_original>
// kernel: conv_block_forward.1
$region0: #{conv_block_forward.1}
  #allocation0 [shape = 'u32[]', space=smem, size = 0x4, offset = 0x4, fixed_abs, tag = 'smem constant byte address 0x4 - core index']
  #allocation1 [shape = 'u32[144,128]{1,0:T(1,128)}', space=vmem, size = 0x12000, scoped, tag = 'internal scratch']
  %s0 = inlined_call_operand.vmem [shape: bf16[2,256,128], index: 0, kind: input, shape index: {}]
  %s1 = inlined_call_operand.vmem [shape: bf16[128,128], index: 1, kind: input, shape index: {}]
  %s2 = inlined_call_operand.vmem [shape: f32[1,128], index: 2, kind: input, shape index: {}]
  %s3 = inlined_call_operand.vmem [shape: f32[2,256,128], index: 3, kind: output, shape index: {}]
  %s4 = sld [smem:[#allocation0]]
  $region45: #{conv_block_forward.1} parent=0
    _
  %s6 = ssub.s32 1, %s4
  %s7 = scalar_select 0, %s6, %s4
  loop: start=0, step=1, limit=4
  $region2: #{conv_block_forward.1} parent=0 // loop_pre_header
    _
  $region3: #{conv_block_forward.1} parent=0 // loop_header
    %s9 = sphi 0, %s13
    %p10 = scmp.ge.s32.totalorder %s9, 4
    %s16 = sphi 0, %s28
    %s17 = sphi 0, %s24
    %s18 = sphi 0, %s16
    %s19 = sphi 0, %s17
    %s20 = sphi 0, %s18
    %s21 = sphi 0, %s19
    %s33 = sphi 0, %s35
    %s36 = sphi 0, %s33
    %s37 = sphi 0, %s36
    %s53 = sphi 0, %s37
    %s57 = sphi 0, %s57
    %s59 = sphi 0, %s57
    %s60 = sphi 0, %s59
    %s74 = sphi 0, %s60
    %s78 = sphi 0, %s78
    %s80 = sphi 0, %s78
    %s81 = sphi 0, %s80
    %s95 = sphi 0, %s81
    %s103 = sphi 0, %s105
    %s106 = sphi 0, %s103
    %s107 = sphi 0, %s106
    %s123 = sphi 0, %s107
  $region4: #{conv_block_forward.1} parent=0 // loop_header_branch
    %12 = sbr.rel (%p10) target = $region8
  $region5: #{conv_block_forward.1} parent=0 // loop_body
    %s14 = ssub.s32 %s9, 1
    %s15 = ssub.s32 %s9, 2
    %s22 = sadd.s32 1, %s17
    %p23 = scmp.ge.s32.totalorder %s22, 1
    %s24 = scalar_select %p23, 0, %s22
    %s25 = sadd.s32 1, %s16
    %s26 = scalar_select %p23, %s25, %s16
    %p27 = scmp.ge.s32.totalorder %s26, 2
    %s28 = scalar_select %p27, 0, %s26
    %s29 = ssub.s32 %s16, %s28
    %s30 = ssub.s32 %s17, %s24
    %s31 = sor.u32 %s29, %s30
    %p32 = scmp.eq.s32.totalorder %s31, 0
    %s34 = sadd.s32 %s33, 1
    %s35 = scalar_select %p32, %s33, %s34
    %p38 = pneg %p32
    %p39 = scmp.eq.s32.totalorder %s9, 1
    %p40 = por %p38, %p39
    %p41 = scmp.ne.s32.totalorder %s33, %s36
    %p42 = scmp.eq.s32.totalorder %s9, 0
    %p43 = por %p41, %p42
    %p44 = scmp.ne.s32.totalorder %s33, %s36
    %p45 = scmp.eq.s32.totalorder %s14, 1
    %p46 = por %p44, %p45
    %p47 = scmp.ne.s32.totalorder %s36, %s37
    %p48 = scmp.eq.s32.totalorder %s14, 0
    %p49 = por %p47, %p48
    %p50 = scmp.ne.s32.totalorder %s36, %s37
    %p51 = scmp.eq.s32.totalorder %s15, 1
    %p52 = por %p50, %p51
    %p54 = scmp.ne.s32.totalorder %s37, %s53
    %p55 = scmp.eq.s32.totalorder %s15, 0
    %p56 = por %p54, %p55
    %s58 = sadd.s32 %s57, 1
    %p61 = scmp.eq.s32.totalorder %s9, 1
    %p62 = scmp.ne.s32.totalorder %s57, %s59
    %p63 = scmp.eq.s32.totalorder %s9, 0
    %p64 = por %p62, %p63
    %p65 = scmp.ne.s32.totalorder %s57, %s59
    %p66 = scmp.eq.s32.totalorder %s14, 1
    %p67 = por %p65, %p66
    %p68 = scmp.ne.s32.totalorder %s59, %s60
    %p69 = scmp.eq.s32.totalorder %s14, 0
    %p70 = por %p68, %p69
    %p71 = scmp.ne.s32.totalorder %s59, %s60
    %p72 = scmp.eq.s32.totalorder %s15, 1
    %p73 = por %p71, %p72
    %p75 = scmp.ne.s32.totalorder %s60, %s74
    %p76 = scmp.eq.s32.totalorder %s15, 0
    %p77 = por %p75, %p76
    %s79 = sadd.s32 %s78, 1
    %p82 = scmp.eq.s32.totalorder %s9, 1
    %p83 = scmp.ne.s32.totalorder %s78, %s80
    %p84 = scmp.eq.s32.totalorder %s9, 0
    %p85 = por %p83, %p84
    %p86 = scmp.ne.s32.totalorder %s78, %s80
    %p87 = scmp.eq.s32.totalorder %s14, 1
    %p88 = por %p86, %p87
    %p89 = scmp.ne.s32.totalorder %s80, %s81
    %p90 = scmp.eq.s32.totalorder %s14, 0
    %p91 = por %p89, %p90
    %p92 = scmp.ne.s32.totalorder %s80, %s81
    %p93 = scmp.eq.s32.totalorder %s15, 1
    %p94 = por %p92, %p93
    %p96 = scmp.ne.s32.totalorder %s81, %s95
    %p97 = scmp.eq.s32.totalorder %s15, 0
    %p98 = por %p96, %p97
    %s99 = ssub.s32 %s16, %s28
    %s100 = ssub.s32 %s17, %s24
    %s101 = sor.u32 %s99, %s100
    %p102 = scmp.eq.s32.totalorder %s101, 0
    %s104 = sadd.s32 %s103, 1
    %s105 = scalar_select %p102, %s103, %s104
    %p108 = pneg %p102
    %p109 = scmp.eq.s32.totalorder %s9, 1
    %p110 = por %p108, %p109
    %p111 = scmp.ne.s32.totalorder %s103, %s106
    %p112 = scmp.eq.s32.totalorder %s9, 0
    %p113 = por %p111, %p112
    %p114 = scmp.ne.s32.totalorder %s103, %s106
    %p115 = scmp.eq.s32.totalorder %s14, 1
    %p116 = por %p114, %p115
    %p117 = scmp.ne.s32.totalorder %s106, %s107
    %p118 = scmp.eq.s32.totalorder %s14, 0
    %p119 = por %p117, %p118
    %p120 = scmp.ne.s32.totalorder %s106, %s107
    %p121 = scmp.eq.s32.totalorder %s15, 1
    %p122 = por %p120, %p121
    %p124 = scmp.ne.s32.totalorder %s107, %s123
    %p125 = scmp.eq.s32.totalorder %s15, 0
    %p126 = por %p124, %p125
    %p127 = scmp.le.s32.totalorder 1, %s9
    %p128 = scmp.lt.s32.totalorder %s9, 3
    %p129 = pnand %p127, %p128
    %p130 = pneg %p129
    // Predicated region
    $region9: #{conv_block_forward.1} parent=5 // pred_check
      _
    $region10: #{conv_block_forward.1} parent=5 // pred_check_branch
      %132 = sbr.rel (%p129) target = $region12
    $region11: #{conv_block_forward.1} parent=5 // pred_region
      %s133 = ssub.s32 %s9, 1
      // Predicated region
      $region13: #{conv_block_forward.1} parent=11 // pred_check
        %p134 = pneg %p70
      $region14: #{conv_block_forward.1} parent=11 // pred_check_branch
        %136 = sbr.rel (%p134) target = $region16
      $region15: #{conv_block_forward.1} parent=11 // pred_region
        _
      $region16: #{conv_block_forward.1} parent=11 // pred_fallthru
        _
      // Predicated region
      $region17: #{conv_block_forward.1} parent=11 // pred_check
        %p137 = pneg %p91
      $region18: #{conv_block_forward.1} parent=11 // pred_check_branch
        %139 = sbr.rel (%p137) target = $region20
      $region19: #{conv_block_forward.1} parent=11 // pred_region
        _
      $region20: #{conv_block_forward.1} parent=11 // pred_fallthru
        _
    $region12: #{conv_block_forward.1} parent=5 // pred_fallthru
      _
    %p140 = scmp.lt.s32.totalorder %s9, 2
    // Predicated region
    $region21: #{conv_block_forward.1} parent=5 // pred_check
      %p141 = pneg %p140
    $region22: #{conv_block_forward.1} parent=5 // pred_check_branch
      %143 = sbr.rel (%p141) target = $region24
    $region23: #{conv_block_forward.1} parent=5 // pred_region
      // Predicated region
      $region25: #{conv_block_forward.1} parent=23 // pred_check
        %p144 = pneg %p43
      $region26: #{conv_block_forward.1} parent=23 // pred_check_branch
        %146 = sbr.rel (%p144) target = $region28
      $region27: #{conv_block_forward.1} parent=23 // pred_region
        %s147 = smul.u32 32, %s17
        %p148 = scmp.lt.s32.totalorder %s16, 1
        %s149 = scalar_select %p148, %s16, 1
        %p150 = scmp.lt.s32.totalorder %s147, 31
        %s151 = scalar_select %p150, %s147, 31
        %s152 = smul.addr %s149, 32
        %s153 = sadd.s32 %s151, %s152
        %s154 = smul.addr %s153, 4
        %s155 = scalar_lea.vmem %s0, %s154
        %s156 = smul.u32 32, %s17
      $region28: #{conv_block_forward.1} parent=23 // pred_fallthru
        _
    $region24: #{conv_block_forward.1} parent=5 // pred_fallthru
      _
    %p157 = scmp.le.s32.totalorder 1, %s9
    %p158 = scmp.lt.s32.totalorder %s9, 3
    %p159 = pnand %p157, %p158
    %p160 = pneg %p159
    // Predicated region
    $region29: #{conv_block_forward.1} parent=5 // pred_check
      _
    $region30: #{conv_block_forward.1} parent=5 // pred_check_branch
      %162 = sbr.rel (%p159) target = $region32
    $region31: #{conv_block_forward.1} parent=5 // pred_region
      %s163 = ssub.s32 %s9, 1
      %s164 = smul.u32 32, %s19
      %p165 = scmp.lt.s32.totalorder %s18, 1
      %s166 = scalar_select %p165, %s18, 1
      %p167 = scmp.lt.s32.totalorder %s164, 31
      %s168 = scalar_select %p167, %s164, 31
      %s169 = smul.addr %s166, 32
      %s170 = sadd.s32 %s168, %s169
      %s171 = smul.addr %s170, 4
      %s172 = scalar_lea.vmem %s0, %s171
      %p173 = pneg %p49
      %p174 = pneg %p46
      %p175 = pneg %p70
      %p176 = pneg %p67
      %p177 = pneg %p91
      %p178 = pneg %p88
      %p179 = pneg %p119
      %p180 = pneg %p116
      %s181 = smul.u32 32, %s19
      %p182 = scmp.lt.s32.totalorder %s18, 1
      %s183 = scalar_select %p182, %s18, 1
      %p184 = scmp.lt.s32.totalorder %s181, 31
      %s185 = scalar_select %p184, %s181, 31
      %s186 = smul.addr %s183, 32
      %s187 = sadd.s32 %s185, %s186
      %s188 = smul.addr %s187, 8
      %s189 = scalar_lea.vmem %s3, %s188
      %s190 = smul.u32 32, %s19
      %p191 = scmp.lt.s32.totalorder %s18, 1
      %s192 = scalar_select %p191, %s18, 1
      %p193 = scmp.lt.s32.totalorder %s190, 31
      %s194 = scalar_select %p193, %s190, 31
      %s195 = smul.addr %s192, 32
      %s196 = sadd.s32 %s194, %s195
      %s197 = smul.addr %s196, 4
      %s198 = scalar_lea.vmem %s0, %s197
      %s199 = smul.u32 32, %s19
      %s200 = smul.u32 32, %s19
      %p201 = scmp.lt.s32.totalorder %s18, 1
      %s202 = scalar_select %p201, %s18, 1
      %p203 = scmp.lt.s32.totalorder %s200, 31
      %s204 = scalar_select %p203, %s200, 31
      %s205 = smul.addr %s202, 32
      %s206 = sadd.s32 %s204, %s205
      %s207 = smul.addr %s206, 8
      %s208 = scalar_lea.vmem %s3, %s207
      %s209 = smul.u32 32, %s19
      %v211 = vld [vmem:[%s198] sm:$0xf]
      %v212 = vld [vmem:[%s198 + $0x4] sm:$0xf]
      %v213 = vld [vmem:[%s198 + $0x8] sm:$0xf]
      %v214 = vld [vmem:[%s198 + $0xc] sm:$0xf]
      %v215 = vld [vmem:[%s198 + $0x10] sm:$0xf]
      %v216 = vld [vmem:[%s198 + $0x14] sm:$0xf]
      %v217 = vld [vmem:[%s198 + $0x18] sm:$0xf]
      %v218 = vld [vmem:[%s198 + $0x1c] sm:$0xf]
      %v219 = vld [vmem:[%s198 + $0x20] sm:$0xf]
      %v220 = vld [vmem:[%s198 + $0x24] sm:$0xf]
      %v221 = vld [vmem:[%s198 + $0x28] sm:$0xf]
      %v222 = vld [vmem:[%s198 + $0x2c] sm:$0xf]
      %v223 = vld [vmem:[%s198 + $0x30] sm:$0xf]
      %v224 = vld [vmem:[%s198 + $0x34] sm:$0xf]
      %v225 = vld [vmem:[%s198 + $0x38] sm:$0xf]
      %v226 = vld [vmem:[%s198 + $0x3c] sm:$0xf]
      %v227 = vld [vmem:[%s198 + $0x40] sm:$0xf]
      %v228 = vld [vmem:[%s198 + $0x44] sm:$0xf]
      %v229 = vld [vmem:[%s198 + $0x48] sm:$0xf]
      %v230 = vld [vmem:[%s198 + $0x4c] sm:$0xf]
      %v231 = vld [vmem:[%s198 + $0x50] sm:$0xf]
      %v232 = vld [vmem:[%s198 + $0x54] sm:$0xf]
      %v233 = vld [vmem:[%s198 + $0x58] sm:$0xf]
      %v234 = vld [vmem:[%s198 + $0x5c] sm:$0xf]
      %v235 = vld [vmem:[%s198 + $0x60] sm:$0xf]
      %v236 = vld [vmem:[%s198 + $0x64] sm:$0xf]
      %v237 = vld [vmem:[%s198 + $0x68] sm:$0xf]
      %v238 = vld [vmem:[%s198 + $0x6c] sm:$0xf]
      %v239 = vld [vmem:[%s198 + $0x70] sm:$0xf]
      %v240 = vld [vmem:[%s198 + $0x74] sm:$0xf]
      %v241 = vld [vmem:[%s198 + $0x78] sm:$0xf]
      %v242 = vld [vmem:[%s198 + $0x7c] sm:$0xf]
      %v243 = vld [vmem:[%s1] sm:$0xf]
      %v244 = vld [vmem:[%s1 + $0x4] sm:$0xf]
      %v245 = vld [vmem:[%s1 + $0x8] sm:$0xf]
      %v246 = vld [vmem:[%s1 + $0xc] sm:$0xf]
      %v247 = vld [vmem:[%s1 + $0x10] sm:$0xf]
      %v248 = vld [vmem:[%s1 + $0x14] sm:$0xf]
      %v249 = vld [vmem:[%s1 + $0x18] sm:$0xf]
      %v250 = vld [vmem:[%s1 + $0x1c] sm:$0xf]
      %v251 = vld [vmem:[%s1 + $0x20] sm:$0xf]
      %v252 = vld [vmem:[%s1 + $0x24] sm:$0xf]
      %v253 = vld [vmem:[%s1 + $0x28] sm:$0xf]
      %v254 = vld [vmem:[%s1 + $0x2c] sm:$0xf]
      %v255 = vld [vmem:[%s1 + $0x30] sm:$0xf]
      %v256 = vld [vmem:[%s1 + $0x34] sm:$0xf]
      %v257 = vld [vmem:[%s1 + $0x38] sm:$0xf]
      %v258 = vld [vmem:[%s1 + $0x3c] sm:$0xf]
      %v259 = vld [vmem:[%s2] sm:$0x1]
      %v261 = vlaneseq
      %v262 = vshrl.u32 %v261, 7
      %v263 = vsub.s32 0, %v262
      %v264 = vrot.slane %v259, %v263
      %v298 = vunpack.c.l.b16 %v211
      %v299 = vunpack.c.l.b16 %v212
      %v300 = vunpack.c.l.b16 %v213
      %v301 = vunpack.c.l.b16 %v214
      %v302 = vunpack.c.l.b16 %v215
      %v303 = vunpack.c.l.b16 %v216
      %v304 = vunpack.c.l.b16 %v217
      %v305 = vunpack.c.l.b16 %v218
      %v306 = vunpack.c.l.b16 %v219
      %v307 = vunpack.c.l.b16 %v220
      %v308 = vunpack.c.l.b16 %v221
      %v309 = vunpack.c.l.b16 %v222
      %v310 = vunpack.c.l.b16 %v223
      %v311 = vunpack.c.l.b16 %v224
      %v312 = vunpack.c.l.b16 %v225
      %v313 = vunpack.c.l.b16 %v226
      %v314 = vunpack.c.l.b16 %v227
      %v315 = vunpack.c.l.b16 %v228
      %v316 = vunpack.c.l.b16 %v229
      %v317 = vunpack.c.l.b16 %v230
      %v318 = vunpack.c.l.b16 %v231
      %v319 = vunpack.c.l.b16 %v232
      %v320 = vunpack.c.l.b16 %v233
      %v321 = vunpack.c.l.b16 %v234
      %v322 = vunpack.c.l.b16 %v235
      %v323 = vunpack.c.l.b16 %v236
      %v324 = vunpack.c.l.b16 %v237
      %v325 = vunpack.c.l.b16 %v238
      %v326 = vunpack.c.l.b16 %v239
      %v327 = vunpack.c.l.b16 %v240
      %v328 = vunpack.c.l.b16 %v241
      %v329 = vunpack.c.l.b16 %v242
      %v330 = vpack.c.b16 %v299, %v298
      %v331 = vpack.c.b16 %v301, %v300
      %v332 = vpack.c.b16 %v303, %v302
      %v333 = vpack.c.b16 %v305, %v304
      %v334 = vpack.c.b16 %v307, %v306
      %v335 = vpack.c.b16 %v309, %v308
      %v336 = vpack.c.b16 %v311, %v310
      %v337 = vpack.c.b16 %v313, %v312
      %v338 = vpack.c.b16 %v315, %v314
      %v339 = vpack.c.b16 %v317, %v316
      %v340 = vpack.c.b16 %v319, %v318
      %v341 = vpack.c.b16 %v321, %v320
      %v342 = vpack.c.b16 %v323, %v322
      %v343 = vpack.c.b16 %v325, %v324
      %v344 = vpack.c.b16 %v327, %v326
      %v345 = vpack.c.b16 %v329, %v328
      %v378 = vunpack.c.l.b16 %v243
      %v379 = vunpack.c.l.b16 %v244
      %v380 = vunpack.c.l.b16 %v245
      %v381 = vunpack.c.l.b16 %v246
      %v382 = vunpack.c.l.b16 %v247
      %v383 = vunpack.c.l.b16 %v248
      %v384 = vunpack.c.l.b16 %v249
      %v385 = vunpack.c.l.b16 %v250
      %v386 = vunpack.c.l.b16 %v251
      %v387 = vunpack.c.l.b16 %v252
      %v388 = vunpack.c.l.b16 %v253
      %v389 = vunpack.c.l.b16 %v254
      %v390 = vunpack.c.l.b16 %v255
      %v391 = vunpack.c.l.b16 %v256
      %v392 = vunpack.c.l.b16 %v257
      %v393 = vunpack.c.l.b16 %v258
      %v394 = vpack.c.b16 %v379, %v378
      %v395 = vpack.c.b16 %v381, %v380
      %v396 = vpack.c.b16 %v383, %v382
      %v397 = vpack.c.b16 %v385, %v384
      %v398 = vpack.c.b16 %v387, %v386
      %v399 = vpack.c.b16 %v389, %v388
      %v400 = vpack.c.b16 %v391, %v390
      %v401 = vpack.c.b16 %v393, %v392
      %410 = vmatprep.subr.bf16.mxu0 0
      %411 = vmatpush1.bf16.msra.mxu0 %v394
      %412 = vmatprep.subr.bf16.mxu0 0
      %413 = vmatpush1.bf16.msra.mxu0 %v395
      %414 = vmatprep.subr.bf16.mxu0 0
      %415 = vmatpush1.bf16.msra.mxu0 %v396
      %416 = vmatprep.subr.bf16.mxu0 0
      %417 = vmatpush1.bf16.msra.mxu0 %v397
      %418 = vmatprep.subr.bf16.mxu0 0
      %419 = vmatpush1.bf16.msra.mxu0 %v398
      %420 = vmatprep.subr.bf16.mxu0 0
      %421 = vmatpush1.bf16.msra.mxu0 %v399
      %422 = vmatprep.subr.bf16.mxu0 0
      %423 = vmatpush1.bf16.msra.mxu0 %v400
      %424 = vmatprep.subr.bf16.mxu0 0
      %425 = vmatpush1.bf16.msra.mxu0 %v401
      %426 = vmatprep.subr.bf16.mxu0 0
      %427 = vmatpush1.bf16.msra.mxu0 0
      %428 = vmatprep.subr.bf16.mxu0 0
      %429 = vmatpush1.bf16.msra.mxu0 0
      %430 = vmatprep.subr.bf16.mxu0 0
      %431 = vmatpush1.bf16.msra.mxu0 0
      %432 = vmatprep.subr.bf16.mxu0 0
      %433 = vmatpush1.bf16.msra.mxu0 0
      %434 = vmatprep.subr.bf16.mxu0 0
      %435 = vmatpush1.bf16.msra.mxu0 0
      %436 = vmatprep.subr.bf16.mxu0 0
      %437 = vmatpush1.bf16.msra.mxu0 0
      %438 = vmatprep.subr.bf16.mxu0 0
      %439 = vmatpush1.bf16.msra.mxu0 0
      %440 = vmatprep.subr.bf16.mxu0 0
      %441 = vmatpush1.bf16.msra.mxu0 0
      %442 = vmatprep.mubr.bf16.mxu0 0
      %443 = vmatmul.mubr.bf16.gmra.mrb[0].mxu0 %v330
      %v444 = vpop.f32.mrb[0].mxu0
      %v445 = vadd.f32 %v264, %v444
      %v446 = vpop.f32.mrb[0].mxu0
      %v447 = vpop.f32.mrb[0].mxu0
      %v448 = vadd.f32 %v264, %v447
      %v449 = vpop.f32.mrb[0].mxu0
      %450 = vmatprep.mubr.bf16.mxu0 0
      %451 = vmatmul.mubr.bf16.gmra.mrb[0].mxu0 %v331
      %v452 = vpop.f32.mrb[0].mxu0
      %v453 = vadd.f32 %v264, %v452
      %v454 = vpop.f32.mrb[0].mxu0
      %v455 = vpop.f32.mrb[0].mxu0
      %v456 = vadd.f32 %v264, %v455
      %v457 = vpop.f32.mrb[0].mxu0
      %458 = vmatprep.mubr.bf16.mxu0 0
      %459 = vmatmul.mubr.bf16.gmra.mrb[0].mxu0 %v332
      %v460 = vpop.f32.mrb[0].mxu0
      %v461 = vadd.f32 %v264, %v460
      %v462 = vpop.f32.mrb[0].mxu0
      %v463 = vpop.f32.mrb[0].mxu0
      %v464 = vadd.f32 %v264, %v463
      %v465 = vpop.f32.mrb[0].mxu0
      %466 = vmatprep.mubr.bf16.mxu0 0
      %467 = vmatmul.mubr.bf16.gmra.mrb[0].mxu0 %v333
      %v468 = vpop.f32.mrb[0].mxu0
      %v469 = vadd.f32 %v264, %v468
      %v470 = vpop.f32.mrb[0].mxu0
      %v471 = vpop.f32.mrb[0].mxu0
      %v472 = vadd.f32 %v264, %v471
      %v473 = vpop.f32.mrb[0].mxu0
      %474 = vmatprep.mubr.bf16.mxu0 0
      %475 = vmatmul.mubr.bf16.gmra.mrb[0].mxu0 %v334
      %v476 = vpop.f32.mrb[0].mxu0
      %v477 = vadd.f32 %v264, %v476
      %v478 = vpop.f32.mrb[0].mxu0
      %v479 = vpop.f32.mrb[0].mxu0
      %v480 = vadd.f32 %v264, %v479
      %v481 = vpop.f32.mrb[0].mxu0
      %482 = vmatprep.mubr.bf16.mxu0 0
      %483 = vmatmul.mubr.bf16.gmra.mrb[0].mxu0 %v335
      %v484 = vpop.f32.mrb[0].mxu0
      %v485 = vadd.f32 %v264, %v484
      %v486 = vpop.f32.mrb[0].mxu0
      %v487 = vpop.f32.mrb[0].mxu0
      %v488 = vadd.f32 %v264, %v487
      %v489 = vpop.f32.mrb[0].mxu0
      %490 = vmatprep.mubr.bf16.mxu0 0
      %491 = vmatmul.mubr.bf16.gmra.mrb[0].mxu0 %v336
      %v492 = vpop.f32.mrb[0].mxu0
      %v493 = vadd.f32 %v264, %v492
      %v494 = vpop.f32.mrb[0].mxu0
      %v495 = vpop.f32.mrb[0].mxu0
      %v496 = vadd.f32 %v264, %v495
      %v497 = vpop.f32.mrb[0].mxu0
      %498 = vmatprep.mubr.bf16.mxu0 0
      %499 = vmatmul.mubr.bf16.gmra.mrb[0].mxu0 %v337
      %v500 = vpop.f32.mrb[0].mxu0
      %v501 = vadd.f32 %v264, %v500
      %v502 = vpop.f32.mrb[0].mxu0
      %v503 = vpop.f32.mrb[0].mxu0
      %v504 = vadd.f32 %v264, %v503
      %v505 = vpop.f32.mrb[0].mxu0
      %506 = vmatprep.mubr.bf16.mxu0 0
      %507 = vmatmul.mubr.bf16.gmra.mrb[0].mxu0 %v338
      %v508 = vpop.f32.mrb[0].mxu0
      %v509 = vadd.f32 %v264, %v508
      %v510 = vpop.f32.mrb[0].mxu0
      %v511 = vpop.f32.mrb[0].mxu0
      %v512 = vadd.f32 %v264, %v511
      %v513 = vpop.f32.mrb[0].mxu0
      %514 = vmatprep.mubr.bf16.mxu0 0
      %515 = vmatmul.mubr.bf16.gmra.mrb[0].mxu0 %v339
      %v516 = vpop.f32.mrb[0].mxu0
      %v517 = vadd.f32 %v264, %v516
      %v518 = vpop.f32.mrb[0].mxu0
      %v519 = vpop.f32.mrb[0].mxu0
      %v520 = vadd.f32 %v264, %v519
      %v521 = vpop.f32.mrb[0].mxu0
      %522 = vmatprep.mubr.bf16.mxu0 0
      %523 = vmatmul.mubr.bf16.gmra.mrb[0].mxu0 %v340
      %v524 = vpop.f32.mrb[0].mxu0
      %v525 = vadd.f32 %v264, %v524
      %v526 = vpop.f32.mrb[0].mxu0
      %v527 = vpop.f32.mrb[0].mxu0
      %v528 = vadd.f32 %v264, %v527
      %v529 = vpop.f32.mrb[0].mxu0
      %530 = vmatprep.mubr.bf16.mxu0 0
      %531 = vmatmul.mubr.bf16.gmra.mrb[0].mxu0 %v341
      %v532 = vpop.f32.mrb[0].mxu0
      %v533 = vadd.f32 %v264, %v532
      %v534 = vpop.f32.mrb[0].mxu0
      %v535 = vpop.f32.mrb[0].mxu0
      %v536 = vadd.f32 %v264, %v535
      %v537 = vpop.f32.mrb[0].mxu0
      %538 = vmatprep.mubr.bf16.mxu0 0
      %539 = vmatmul.mubr.bf16.gmra.mrb[0].mxu0 %v342
      %v540 = vpop.f32.mrb[0].mxu0
      %v541 = vadd.f32 %v264, %v540
      %v542 = vpop.f32.mrb[0].mxu0
      %v543 = vpop.f32.mrb[0].mxu0
      %v544 = vadd.f32 %v264, %v543
      %v545 = vpop.f32.mrb[0].mxu0
      %546 = vmatprep.mubr.bf16.mxu0 0
      %547 = vmatmul.mubr.bf16.gmra.mrb[0].mxu0 %v343
      %v548 = vpop.f32.mrb[0].mxu0
      %v549 = vadd.f32 %v264, %v548
      %v550 = vpop.f32.mrb[0].mxu0
      %v551 = vpop.f32.mrb[0].mxu0
      %v552 = vadd.f32 %v264, %v551
      %v553 = vpop.f32.mrb[0].mxu0
      %554 = vmatprep.mubr.bf16.mxu0 0
      %555 = vmatmul.mubr.bf16.gmra.mrb[0].mxu0 %v344
      %v556 = vpop.f32.mrb[0].mxu0
      %v557 = vadd.f32 %v264, %v556
      %v558 = vpop.f32.mrb[0].mxu0
      %v559 = vpop.f32.mrb[0].mxu0
      %v560 = vadd.f32 %v264, %v559
      %v561 = vpop.f32.mrb[0].mxu0
      %562 = vmatprep.mubr.bf16.mxu0 0
      %563 = vmatmul.mubr.bf16.gmra.mrb[0].mxu0 %v345
      %v564 = vpop.f32.mrb[0].mxu0
      %v565 = vadd.f32 %v264, %v564
      %v566 = vpop.f32.mrb[0].mxu0
      %v567 = vpop.f32.mrb[0].mxu0
      %v568 = vadd.f32 %v264, %v567
      %v569 = vpop.f32.mrb[0].mxu0
      %570 = vdwg.mxu0
      %v571 = vmax.f32 %v445, 0.0
      %v572 = vmax.f32 %v448, 0.0
      %v573 = vmax.f32 %v453, 0.0
      %v574 = vmax.f32 %v456, 0.0
      %v575 = vmax.f32 %v461, 0.0
      %v576 = vmax.f32 %v464, 0.0
      %v577 = vmax.f32 %v469, 0.0
      %v578 = vmax.f32 %v472, 0.0
      %v579 = vmax.f32 %v477, 0.0
      %v580 = vmax.f32 %v480, 0.0
      %v581 = vmax.f32 %v485, 0.0
      %v582 = vmax.f32 %v488, 0.0
      %v583 = vmax.f32 %v493, 0.0
      %v584 = vmax.f32 %v496, 0.0
      %v585 = vmax.f32 %v501, 0.0
      %v586 = vmax.f32 %v504, 0.0
      %v587 = vmax.f32 %v509, 0.0
      %v588 = vmax.f32 %v512, 0.0
      %v589 = vmax.f32 %v517, 0.0
      %v590 = vmax.f32 %v520, 0.0
      %v591 = vmax.f32 %v525, 0.0
      %v592 = vmax.f32 %v528, 0.0
      %v593 = vmax.f32 %v533, 0.0
      %v594 = vmax.f32 %v536, 0.0
      %v595 = vmax.f32 %v541, 0.0
      %v596 = vmax.f32 %v544, 0.0
      %v597 = vmax.f32 %v549, 0.0
      %v598 = vmax.f32 %v552, 0.0
      %v599 = vmax.f32 %v557, 0.0
      %v600 = vmax.f32 %v560, 0.0
      %v601 = vmax.f32 %v565, 0.0
      %v602 = vmax.f32 %v568, 0.0
      %603 = vst [vmem:[%s208] sm:$0xff] %v571
      %604 = vst [vmem:[%s208 + $0x8] sm:$0xff] %v572
      %605 = vst [vmem:[%s208 + $0x10] sm:$0xff] %v573
      %606 = vst [vmem:[%s208 + $0x18] sm:$0xff] %v574
      %607 = vst [vmem:[%s208 + $0x20] sm:$0xff] %v575
      %608 = vst [vmem:[%s208 + $0x28] sm:$0xff] %v576
      %609 = vst [vmem:[%s208 + $0x30] sm:$0xff] %v577
      %610 = vst [vmem:[%s208 + $0x38] sm:$0xff] %v578
      %611 = vst [vmem:[%s208 + $0x40] sm:$0xff] %v579
      %612 = vst [vmem:[%s208 + $0x48] sm:$0xff] %v580
      %613 = vst [vmem:[%s208 + $0x50] sm:$0xff] %v581
      %614 = vst [vmem:[%s208 + $0x58] sm:$0xff] %v582
      %615 = vst [vmem:[%s208 + $0x60] sm:$0xff] %v583
      %616 = vst [vmem:[%s208 + $0x68] sm:$0xff] %v584
      %617 = vst [vmem:[%s208 + $0x70] sm:$0xff] %v585
      %618 = vst [vmem:[%s208 + $0x78] sm:$0xff] %v586
      %619 = vst [vmem:[%s208 + $0x80] sm:$0xff] %v587
      %620 = vst [vmem:[%s208 + $0x88] sm:$0xff] %v588
      %621 = vst [vmem:[%s208 + $0x90] sm:$0xff] %v589
      %622 = vst [vmem:[%s208 + $0x98] sm:$0xff] %v590
      %623 = vst [vmem:[%s208 + $0xa0] sm:$0xff] %v591
      %624 = vst [vmem:[%s208 + $0xa8] sm:$0xff] %v592
      %625 = vst [vmem:[%s208 + $0xb0] sm:$0xff] %v593
      %626 = vst [vmem:[%s208 + $0xb8] sm:$0xff] %v594
      %627 = vst [vmem:[%s208 + $0xc0] sm:$0xff] %v595
      %628 = vst [vmem:[%s208 + $0xc8] sm:$0xff] %v596
      %629 = vst [vmem:[%s208 + $0xd0] sm:$0xff] %v597
      %630 = vst [vmem:[%s208 + $0xd8] sm:$0xff] %v598
      %631 = vst [vmem:[%s208 + $0xe0] sm:$0xff] %v599
      %632 = vst [vmem:[%s208 + $0xe8] sm:$0xff] %v600
      %633 = vst [vmem:[%s208 + $0xf0] sm:$0xff] %v601
      %634 = vst [vmem:[%s208 + $0xf8] sm:$0xff] %v602
      %s635 = smul.u32 32, %s19
      %p636 = scmp.lt.s32.totalorder %s18, 1
      %s637 = scalar_select %p636, %s18, 1
      %p638 = scmp.lt.s32.totalorder %s635, 31
      %s639 = scalar_select %p638, %s635, 31
      %s640 = smul.addr %s637, 32
      %s641 = sadd.s32 %s639, %s640
      %s642 = smul.addr %s641, 8
      %s643 = scalar_lea.vmem %s3, %s642
      // Predicated region
      $region33: #{conv_block_forward.1} parent=31 // pred_check
        %p644 = pneg %p116
      $region34: #{conv_block_forward.1} parent=31 // pred_check_branch
        %646 = sbr.rel (%p644) target = $region36
      $region35: #{conv_block_forward.1} parent=31 // pred_region
        %s647 = smul.u32 32, %s19
      $region36: #{conv_block_forward.1} parent=31 // pred_fallthru
        _
    $region32: #{conv_block_forward.1} parent=5 // pred_fallthru
      _
    %p648 = scmp.le.s32.totalorder 2, %s9
    // Predicated region
    $region37: #{conv_block_forward.1} parent=5 // pred_check
      %p649 = pneg %p648
    $region38: #{conv_block_forward.1} parent=5 // pred_check_branch
      %651 = sbr.rel (%p649) target = $region40
    $region39: #{conv_block_forward.1} parent=5 // pred_region
      %s652 = ssub.s32 %s9, 2
      // Predicated region
      $region41: #{conv_block_forward.1} parent=39 // pred_check
        %p653 = pneg %p122
      $region42: #{conv_block_forward.1} parent=39 // pred_check_branch
        %655 = sbr.rel (%p653) target = $region44
      $region43: #{conv_block_forward.1} parent=39 // pred_region
        %s656 = smul.u32 32, %s21
        %p657 = scmp.lt.s32.totalorder %s20, 1
        %s658 = scalar_select %p657, %s20, 1
        %p659 = scmp.lt.s32.totalorder %s656, 31
        %s660 = scalar_select %p659, %s656, 31
        %s661 = smul.addr %s658, 32
        %s662 = sadd.s32 %s660, %s661
        %s663 = smul.addr %s662, 8
        %s664 = scalar_lea.vmem %s3, %s663
      $region44: #{conv_block_forward.1} parent=39 // pred_fallthru
        _
    $region40: #{conv_block_forward.1} parent=5 // pred_fallthru
      _
  $region6: #{conv_block_forward.1} parent=0 // loop_footer
    %s13 = sadd.s32 1, %s9
  $region7: #{conv_block_forward.1} parent=0 // loop_footer_branch
    %8 = sbr.rel target = $region3
  $region8: #{conv_block_forward.1} parent=0 // loop_exit
    _

</llo_original>
